<compile_context>
chip_gen: v7x
topology: tpu7x:2x2x1
jax: 0.10.0
libtpu: 0.0.40
codegen_flags: <defaults>
</compile_context>

<pallas_src>
import jax
import jax.numpy as jnp
from jax.experimental import pallas as pl
from jax.experimental.pallas import tpu as pltpu


def _round_up(n, m):
    return ((n + m - 1) // m) * m


def _vmem_capacity_bytes(default=64 * 1024 * 1024):
    """Physical VMEM per core; fall back to the smallest current part (v7x, 64 MiB)."""
    try:
        info = pltpu.get_tpu_info()
        cap = getattr(info, "vmem_capacity_bytes", None)
        if cap:
            return int(cap)
    except Exception:
        pass
    return default


def mlp_kernel(x_ref, w1_ref, b1_ref, w2_ref, b2_ref, w3_ref, b3_ref, o_ref):
    # x arrives in its HBM dtype (f32); cast to bf16 in-kernel so the dominant HBM
    # stream is read exactly once (no wrapper-side cast/copy pass).
    x = x_ref[...].astype(jnp.bfloat16)
    # Layer 1: Linear(input_size, 128) + ReLU   (bf16 MXU operands, f32 accumulate)
    h1 = jnp.dot(x, w1_ref[...], preferred_element_type=jnp.float32)
    h1 = jnp.maximum(h1 + b1_ref[...], 0.0)
    # Layer 2: Linear(128, 64) + ReLU
    h2 = jnp.dot(h1.astype(jnp.bfloat16), w2_ref[...],
                 preferred_element_type=jnp.float32)
    h2 = jnp.maximum(h2 + b2_ref[...], 0.0)
    # Layer 3: Linear(64, 1) as VPU multiply + lane reduction (avoid an N=1 MXU matmul)
    out = jnp.sum(h2 * w3_ref[...], axis=-1, keepdims=True) + b3_ref[...]  # (TB, 1) f32
    o_ref[...] = out.astype(o_ref.dtype)


def _choose_tile(B, in_size, tile_budget_bytes, tb_cap):
    """Largest batch tile (multiple of 8) whose working set fits the VMEM budget."""
    # Per-batch-row VMEM bytes while one grid step is in flight:
    per_row = (
        2 * in_size * 4        # x tile, f32, double-buffered by the pipeline
        + in_size * 2          # in-kernel bf16 copy of x
        + 128 * (4 + 2)        # h1 f32 + its bf16 copy
        + 64 * (4 + 2)         # h2 f32 (+ slack)
        + 2 * 4                # (TB, 1) f32 output, double-buffered
    )
    # Resident params (assume double-buffered even with constant index_maps).
    resident = 2 * (in_size * 128 * 2 + 128 * 64 * 2 + (128 + 64 + 64 + 1) * 4)
    avail = tile_budget_bytes - resident - (2 << 20)   # ~2 MiB compiler headroom
    tb = max(avail // per_row, 8)
    tb = min(tb, tb_cap)
    # Keep >= ~4 grid steps when the batch is large (pipeline depth + v7x megacore).
    if B >= 4 * 1024:
        tb = min(tb, _round_up(pl.cdiv(B, 4), 8))
    tb = max(8, (tb // 8) * 8)
    tb = min(tb, _round_up(B, 8))   # never larger than the (8-rounded) batch
    return int(tb)


def mlp_forward(x, params, *, tb_cap=8192):
    """x: (B, input_size) float32; params from init_params. Returns (B, 1) float32."""
    B, in_size = x.shape
    w1, b1 = params["w1"], params["b1"]
    w2, b2 = params["w2"], params["b2"]
    w3, b3 = params["w3"], params["b3"]

    phys_vmem = _vmem_capacity_bytes()
    # v7x (64 MiB phys): ~48 MiB limit / ~38 MiB tile budget.
    # v5e/v6e (128 MiB phys): 96 MiB limit / ~76 MiB tile budget.
    vmem_limit = int(min(phys_vmem * 3 // 4, 96 * 1024 * 1024))
    tile_budget = int(phys_vmem * 0.6)

    TB = _choose_tile(B, in_size, tile_budget, tb_cap)
    grid = (pl.cdiv(B, TB),)            # ragged last block handled by Pallas clipping
    const2d = lambda i: (0, 0)          # weights/biases: DMA once, stay VMEM-resident

    flops = 2 * B * (in_size * 128 + 128 * 64 + 64)
    bytes_accessed = (
        x.size * 4                                      # f32 activations in
        + B * 4                                         # f32 output
        + (w1.size + w2.size) * 2                       # bf16 weights
        + (b1.size + b2.size + w3.size + b3.size) * 4   # f32 bias/last-layer params
    )

    out_col = pl.pallas_call(
        mlp_kernel,
        out_shape=jax.ShapeDtypeStruct((B, 1), jnp.float32),
        grid=grid,
        in_specs=[
            pl.BlockSpec((TB, in_size), lambda i: (i, 0)),   # x: streamed per batch tile
            pl.BlockSpec((in_size, 128), const2d),           # w1 (bf16)
            pl.BlockSpec((1, 128), const2d),                 # b1 (f32)
            pl.BlockSpec((128, 64), const2d),                # w2 (bf16)
            pl.BlockSpec((1, 64), const2d),                  # b2 (f32)
            pl.BlockSpec((1, 64), const2d),                  # w3 row (f32)
            pl.BlockSpec((1, 1), const2d),                   # b3 (f32)
        ],
        out_specs=pl.BlockSpec((TB, 1), lambda i: (i, 0)),
        compiler_params=pltpu.CompilerParams(
            dimension_semantics=("parallel",),               # megacore sharding on v7x
            vmem_limit_bytes=vmem_limit,
        ),
        cost_estimate=pl.CostEstimate(
            flops=flops, transcendentals=0, bytes_accessed=bytes_accessed),
    )(x, w1, b1, w2, b2, w3, b3)

    return out_col


def init_params(key, input_size):
    """Parameters matching the nn.Linear shapes of the module (weights transposed)."""
    ks = jax.random.split(key, 6)

    def linear(kw, kb, fan_in, fan_out, w_dtype):
        # torch default init: U(-1/sqrt(fan_in), 1/sqrt(fan_in))
        bound = 1.0 / (fan_in ** 0.5)
        w = jax.random.uniform(kw, (fan_in, fan_out), jnp.float32, -bound, bound)
        b = jax.random.uniform(kb, (1, fan_out), jnp.float32, -bound, bound)
        return w.astype(w_dtype), b

    w1, b1 = linear(ks[0], ks[1], input_size, 128, jnp.bfloat16)
    w2, b2 = linear(ks[2], ks[3], 128, 64, jnp.bfloat16)
    w3_col, b3 = linear(ks[4], ks[5], 64, 1, jnp.float32)
    w3 = w3_col.reshape(1, 64)   # (1, 64) row for the in-kernel VPU reduction
    return {"w1": w1, "b1": b1, "w2": w2, "b2": b2, "w3": w3, "b3": b3}


def mlp_reference(x, params):
    """Pure-JAX reference with the same bf16-operand / f32-accumulate recipe."""
    xb = x.astype(jnp.bfloat16)
    h1 = jnp.maximum(
        jnp.dot(xb, params["w1"], preferred_element_type=jnp.float32) + params["b1"], 0.0)
    h2 = jnp.maximum(
        jnp.dot(h1.astype(jnp.bfloat16), params["w2"],
                preferred_element_type=jnp.float32) + params["b2"], 0.0)
    return jnp.sum(h2 * params["w3"], axis=-1, keepdims=True) + params["b3"]


if __name__ == "__main__":
    key = jax.random.PRNGKey(0)
    k_x, k_p, k_x2 = jax.random.split(key, 3)

    # Small primary check (matches the module spec's tiny-shape smoke test).
    batch, input_size = 8, 32
    x = jax.random.normal(k_x, (batch, input_size), jnp.float32)
    params = init_params(k_p, input_size)

    out = mlp_forward(x, params)
    jax.block_until_ready(out)
    ref = mlp_reference(x, params)
    assert out.shape == (batch, 1)
    assert jnp.allclose(out, ref, atol=2e-3, rtol=2e-3)

    # Secondary check: multi-step grid + ragged last block (no padding path).
    batch2 = 2050
    x2 = jax.random.normal(k_x2, (batch2, input_size), jnp.float32)
    out2 = mlp_forward(x2, params, tb_cap=512)
    jax.block_until_ready(out2)
    ref2 = mlp_reference(x2, params)
    assert out2.shape == (batch2, 1)
    assert jnp.allclose(out2, ref2, atol=2e-3, rtol=2e-3)

    print("KERNEL_OK")
</pallas_src>

<mosaic_0001>
module attributes {stable_mosaic.version = 11 : i64} {
  func.func @mlp_kernel(%arg0: i32, %arg1: memref<8x32xf32, #tpu.memory_space<vmem>>, %arg2: memref<32x128xbf16, #tpu.memory_space<vmem>>, %arg3: memref<1x128xf32, #tpu.memory_space<vmem>>, %arg4: memref<128x64xbf16, #tpu.memory_space<vmem>>, %arg5: memref<1x64xf32, #tpu.memory_space<vmem>>, %arg6: memref<1x64xf32, #tpu.memory_space<vmem>>, %arg7: memref<1x1xf32, #tpu.memory_space<vmem>>, %arg8: memref<8x1xf32, #tpu.memory_space<vmem>>) attributes {dimension_semantics = [#tpu.dimension_semantics<parallel>], iteration_bounds = array<i64: 1>, scalar_prefetch = 0 : i64, scratch_operands = 0 : i64, tpu.core_type = #tpu.core_type<tc>, window_params = [{transform_indices = @transform_0, window_bounds = array<i64: 8, 32>}, {pipeline_mode = #tpu.pipeline_mode<synchronous>, transform_indices = @transform_1, window_bounds = array<i64: 32, 128>}, {pipeline_mode = #tpu.pipeline_mode<synchronous>, transform_indices = @transform_2, window_bounds = array<i64: 1, 128>}, {pipeline_mode = #tpu.pipeline_mode<synchronous>, transform_indices = @transform_3, window_bounds = array<i64: 128, 64>}, {pipeline_mode = #tpu.pipeline_mode<synchronous>, transform_indices = @transform_4, window_bounds = array<i64: 1, 64>}, {pipeline_mode = #tpu.pipeline_mode<synchronous>, transform_indices = @transform_5, window_bounds = array<i64: 1, 64>}, {pipeline_mode = #tpu.pipeline_mode<synchronous>, transform_indices = @transform_6, window_bounds = array<i64: 1, 1>}, {transform_indices = @transform_7, window_bounds = array<i64: 8, 1>}]} {
    %c0 = arith.constant 0 : index
    %c0_0 = arith.constant 0 : index
    %0 = vector.load %arg1[%c0, %c0_0] : memref<8x32xf32, #tpu.memory_space<vmem>>, vector<8x32xf32>
    %1 = arith.truncf %0 : vector<8x32xf32> to vector<8x32xbf16>
    %c0_1 = arith.constant 0 : index
    %c0_2 = arith.constant 0 : index
    %2 = vector.load %arg2[%c0_1, %c0_2] : memref<32x128xbf16, #tpu.memory_space<vmem>>, vector<32x128xbf16>
    %cst = arith.constant dense<0.000000e+00> : vector<8x128xf32>
    %3 = tpu.matmul %1, %2, %cst {dimension_numbers = #tpu.dot_dimension_numbers<[1], [0], [0], [1], [0, 0, 1, 1], [], []>} : vector<8x32xbf16>, vector<32x128xbf16>, vector<8x128xf32> -> vector<8x128xf32>
    %c0_3 = arith.constant 0 : index
    %c0_4 = arith.constant 0 : index
    %4 = vector.load %arg3[%c0_3, %c0_4] : memref<1x128xf32, #tpu.memory_space<vmem>>, vector<1x128xf32>
    %5 = vector.broadcast %4 : vector<1x128xf32> to vector<8x128xf32>
    %6 = arith.addf %3, %5 : vector<8x128xf32>
    %cst_5 = arith.constant 0.000000e+00 : f32
    %7 = vector.broadcast %cst_5 : f32 to vector<8x128xf32>
    %8 = arith.maximumf %6, %7 : vector<8x128xf32>
    %9 = arith.truncf %8 : vector<8x128xf32> to vector<8x128xbf16>
    %c0_6 = arith.constant 0 : index
    %c0_7 = arith.constant 0 : index
    %10 = vector.load %arg4[%c0_6, %c0_7] : memref<128x64xbf16, #tpu.memory_space<vmem>>, vector<128x64xbf16>
    %cst_8 = arith.constant dense<0.000000e+00> : vector<8x64xf32>
    %11 = tpu.matmul %9, %10, %cst_8 {dimension_numbers = #tpu.dot_dimension_numbers<[1], [0], [0], [1], [0, 0, 1, 1], [], []>} : vector<8x128xbf16>, vector<128x64xbf16>, vector<8x64xf32> -> vector<8x64xf32>
    %c0_9 = arith.constant 0 : index
    %c0_10 = arith.constant 0 : index
    %12 = vector.load %arg5[%c0_9, %c0_10] : memref<1x64xf32, #tpu.memory_space<vmem>>, vector<1x64xf32>
    %13 = vector.broadcast %12 : vector<1x64xf32> to vector<8x64xf32>
    %14 = arith.addf %11, %13 : vector<8x64xf32>
    %cst_11 = arith.constant 0.000000e+00 : f32
    %15 = vector.broadcast %cst_11 : f32 to vector<8x64xf32>
    %16 = arith.maximumf %14, %15 : vector<8x64xf32>
    %c0_12 = arith.constant 0 : index
    %c0_13 = arith.constant 0 : index
    %17 = vector.load %arg6[%c0_12, %c0_13] : memref<1x64xf32, #tpu.memory_space<vmem>>, vector<1x64xf32>
    %18 = vector.broadcast %17 : vector<1x64xf32> to vector<8x64xf32>
    %19 = arith.mulf %16, %18 : vector<8x64xf32>
    %cst_14 = arith.constant dense<0.000000e+00> : vector<8xf32>
    %20 = vector.multi_reduction <add>, %19, %cst_14 [1] : vector<8x64xf32> to vector<8xf32>
    %21 = vector.shape_cast %20 : vector<8xf32> to vector<8x1xf32>
    %c0_15 = arith.constant 0 : index
    %c0_16 = arith.constant 0 : index
    %22 = vector.load %arg7[%c0_15, %c0_16] : memref<1x1xf32, #tpu.memory_space<vmem>>, vector<1x1xf32>
    %23 = vector.broadcast %22 : vector<1x1xf32> to vector<8x1xf32>
    %24 = arith.addf %21, %23 : vector<8x1xf32>
    %c0_17 = arith.constant 0 : index
    %c0_18 = arith.constant 0 : index
    %25 = vector.load %arg8[%c0_17, %c0_18] : memref<8x1xf32, #tpu.memory_space<vmem>>, vector<8x1xf32>
    tpu.vector_store %arg8[%c0_17, %c0_18], %24 {strides = array<i32>} : memref<8x1xf32, #tpu.memory_space<vmem>>, vector<8x1xf32>,
    return
  }
  func.func @transform_0(%arg0: i32) -> (i32, i32) {
    %c0_i32 = arith.constant 0 : i32
    %c0_i32_0 = arith.constant 0 : i32
    return %arg0, %c0_i32 : i32, i32
  }
  func.func @transform_1(%arg0: i32) -> (i32, i32) {
    %c0_i32 = arith.constant 0 : i32
    %c0_i32_0 = arith.constant 0 : i32
    %c0_i32_1 = arith.constant 0 : i32
    return %c0_i32, %c0_i32_0 : i32, i32
  }
  func.func @transform_2(%arg0: i32) -> (i32, i32) {
    %c0_i32 = arith.constant 0 : i32
    %c0_i32_0 = arith.constant 0 : i32
    %c0_i32_1 = arith.constant 0 : i32
    return %c0_i32, %c0_i32_0 : i32, i32
  }
  func.func @transform_3(%arg0: i32) -> (i32, i32) {
    %c0_i32 = arith.constant 0 : i32
    %c0_i32_0 = arith.constant 0 : i32
    %c0_i32_1 = arith.constant 0 : i32
    return %c0_i32, %c0_i32_0 : i32, i32
  }
  func.func @transform_4(%arg0: i32) -> (i32, i32) {
    %c0_i32 = arith.constant 0 : i32
    %c0_i32_0 = arith.constant 0 : i32
    %c0_i32_1 = arith.constant 0 : i32
    return %c0_i32, %c0_i32_0 : i32, i32
  }
  func.func @transform_5(%arg0: i32) -> (i32, i32) {
    %c0_i32 = arith.constant 0 : i32
    %c0_i32_0 = arith.constant 0 : i32
    %c0_i32_1 = arith.constant 0 : i32
    return %c0_i32, %c0_i32_0 : i32, i32
  }
  func.func @transform_6(%arg0: i32) -> (i32, i32) {
    %c0_i32 = arith.constant 0 : i32
    %c0_i32_0 = arith.constant 0 : i32
    %c0_i32_1 = arith.constant 0 : i32
    return %c0_i32, %c0_i32_0 : i32, i32
  }
  func.func @transform_7(%arg0: i32) -> (i32, i32) {
    %c0_i32 = arith.constant 0 : i32
    %c0_i32_0 = arith.constant 0 : i32
    return %arg0, %c0_i32 : i32, i32
  }
}

</mosaic_0001>

<llo_original>
// kernel: tpu_custom_call.1
$region0: #{tpu_custom_call.1}
  #allocation0 [shape = 'u32[]', space=smem, size = 0x4, offset = 0x4, fixed_abs, tag = 'smem constant byte address 0x4 - core index']
  #allocation1 [shape = 'u32[144,128]{1,0:T(1,128)}', space=vmem, size = 0x12000, scoped, tag = 'internal scratch']
  #allocation2 [shape = 'f32[1,1]{1,0:T(1,128)S(1)}', space=vmem, size = 0x200, scoped, tag = 'scoped memory for tpu_custom_call.1']
  %s0 = inlined_call_operand.vmem [shape: f32[8,32], index: 0, kind: input, shape index: {}]
  %s1 = inlined_call_operand.vmem [shape: bf16[32,128], index: 1, kind: input, shape index: {}]
  %s2 = inlined_call_operand.vmem [shape: f32[1,128], index: 2, kind: input, shape index: {}]
  %s3 = inlined_call_operand.vmem [shape: bf16[128,64], index: 3, kind: input, shape index: {}]
  %s4 = inlined_call_operand.vmem [shape: f32[1,64], index: 4, kind: input, shape index: {}]
  %s5 = inlined_call_operand.vmem [shape: f32[1,64], index: 5, kind: input, shape index: {}]
  %s6 = inlined_call_operand.<no memory space> [shape: f32[1,1], index: 6, kind: input, shape index: {}]
  %s7 = inlined_call_operand.vmem [shape: f32[8,1], index: 7, kind: output, shape index: {}]
  %s8 = sld [smem:[#allocation0]]
  $region38: #{tpu_custom_call.1} parent=0
    _
  %s10 = ssub.s32 1, %s8
  %s11 = scalar_select 0, %s10, %s8
  %v12 = vstv %s6
  %13 = vst [vmem:[#allocation2] sm:$0x1] %v12
  // Predicated region
  $region2: #{tpu_custom_call.1} parent=0 // pred_check
    _
  $region3: #{tpu_custom_call.1} parent=0 // pred_check_branch
    %15 = sbr.rel (0) target = $region5
  $region4: #{tpu_custom_call.1} parent=0 // pred_region
    _
  $region5: #{tpu_custom_call.1} parent=0 // pred_fallthru
    _
  // Predicated region
  $region6: #{tpu_custom_call.1} parent=0 // pred_check
    _
  $region7: #{tpu_custom_call.1} parent=0 // pred_check_branch
    %17 = sbr.rel (0) target = $region9
  $region8: #{tpu_custom_call.1} parent=0 // pred_region
    _
  $region9: #{tpu_custom_call.1} parent=0 // pred_fallthru
    _
  // Predicated region
  $region10: #{tpu_custom_call.1} parent=0 // pred_check
    _
  $region11: #{tpu_custom_call.1} parent=0 // pred_check_branch
    %19 = sbr.rel (0) target = $region13
  $region12: #{tpu_custom_call.1} parent=0 // pred_region
    _
  $region13: #{tpu_custom_call.1} parent=0 // pred_fallthru
    _
  // Predicated region
  $region14: #{tpu_custom_call.1} parent=0 // pred_check
    _
  $region15: #{tpu_custom_call.1} parent=0 // pred_check_branch
    %21 = sbr.rel (0) target = $region17
  $region16: #{tpu_custom_call.1} parent=0 // pred_region
    _
  $region17: #{tpu_custom_call.1} parent=0 // pred_fallthru
    _
  // Predicated region
  $region18: #{tpu_custom_call.1} parent=0 // pred_check
    _
  $region19: #{tpu_custom_call.1} parent=0 // pred_check_branch
    %23 = sbr.rel (0) target = $region21
  $region20: #{tpu_custom_call.1} parent=0 // pred_region
    _
  $region21: #{tpu_custom_call.1} parent=0 // pred_fallthru
    _
  // Predicated region
  $region22: #{tpu_custom_call.1} parent=0 // pred_check
    _
  $region23: #{tpu_custom_call.1} parent=0 // pred_check_branch
    %25 = sbr.rel (0) target = $region25
  $region24: #{tpu_custom_call.1} parent=0 // pred_region
    _
  $region25: #{tpu_custom_call.1} parent=0 // pred_fallthru
    _
  // Predicated region
  $region26: #{tpu_custom_call.1} parent=0 // pred_check
    _
  $region27: #{tpu_custom_call.1} parent=0 // pred_check_branch
    %27 = sbr.rel (0) target = $region29
  $region28: #{tpu_custom_call.1} parent=0 // pred_region
    _
  $region29: #{tpu_custom_call.1} parent=0 // pred_fallthru
    _
  %v29 = vld [vmem:[%s0] sm:$0xff]
  %v30 = vpack.c.bf16 %v29, %v29
  %v31 = vld [vmem:[%s1] sm:$0xf]
  %v32 = vld [vmem:[%s1 + $0x4] sm:$0xf]
  %v33 = vld [vmem:[%s1 + $0x8] sm:$0xf]
  %v34 = vld [vmem:[%s1 + $0xc] sm:$0xf]
  %v35 = vld [vmem:[%s2] sm:$0x1]
  %v37 = vlaneseq
  %v38 = vshrl.u32 %v37, 7
  %v39 = vsub.s32 0, %v38
  %v40 = vrot.slane %v35, %v39
  %v46 = vunpack.c.l.b16 %v31
  %v47 = vunpack.c.l.b16 %v32
  %v48 = vunpack.c.l.b16 %v33
  %v49 = vunpack.c.l.b16 %v34
  %v50 = vpack.c.b16 %v47, %v46
  %v51 = vpack.c.b16 %v49, %v48
  %vm54 = vcmask 261120
  %v56 = vsel %vm54, %v30, 0
  %58 = vmatprep.subr.bf16.mxu0 0
  %59 = vmatpush1.bf16.msra.mxu0 %v50
  %60 = vmatprep.subr.bf16.mxu0 0
  %61 = vmatpush1.bf16.msra.mxu0 %v51
  %62 = vmatprep.subr.bf16.mxu0 0
  %63 = vmatpush1.bf16.msra.mxu0 0
  %64 = vmatprep.subr.bf16.mxu0 0
  %65 = vmatpush1.bf16.msra.mxu0 0
  %66 = vmatprep.subr.bf16.mxu0 0
  %67 = vmatpush1.bf16.msra.mxu0 0
  %68 = vmatprep.subr.bf16.mxu0 0
  %69 = vmatpush1.bf16.msra.mxu0 0
  %70 = vmatprep.subr.bf16.mxu0 0
  %71 = vmatpush1.bf16.msra.mxu0 0
  %72 = vmatprep.subr.bf16.mxu0 0
  %73 = vmatpush1.bf16.msra.mxu0 0
  %74 = vmatprep.subr.bf16.mxu0 0
  %75 = vmatpush1.bf16.msra.mxu0 0
  %76 = vmatprep.subr.bf16.mxu0 0
  %77 = vmatpush1.bf16.msra.mxu0 0
  %78 = vmatprep.subr.bf16.mxu0 0
  %79 = vmatpush1.bf16.msra.mxu0 0
  %80 = vmatprep.subr.bf16.mxu0 0
  %81 = vmatpush1.bf16.msra.mxu0 0
  %82 = vmatprep.subr.bf16.mxu0 0
  %83 = vmatpush1.bf16.msra.mxu0 0
  %84 = vmatprep.subr.bf16.mxu0 0
  %85 = vmatpush1.bf16.msra.mxu0 0
  %86 = vmatprep.subr.bf16.mxu0 0
  %87 = vmatpush1.bf16.msra.mxu0 0
  %88 = vmatprep.subr.bf16.mxu0 0
  %89 = vmatpush1.bf16.msra.mxu0 0
  %90 = vmatprep.mubr.bf16.mxu0 0
  %91 = vmatmul.mubr.bf16.gmra.mrb[0].mxu0 %v56
  %v92 = vpop.f32.mrb[0].mxu0
  %v93 = vadd.f32 %v40, %v92
  %v94 = vpop.f32.mrb[0].mxu0
  %v95 = vpop.f32.mrb[0].mxu0
  %v96 = vpop.f32.mrb[0].mxu0
  %97 = vdwg.mxu0
  %v98 = vmax.f32 %v93, 0.0
  %v99 = vpack.c.bf16 %v98, %v98
  %v100 = vld [vmem:[%s3] sm:$0xf]
  %v101 = vld [vmem:[%s3 + $0x4] sm:$0xf]
  %v102 = vld [vmem:[%s3 + $0x8] sm:$0xf]
  %v103 = vld [vmem:[%s3 + $0xc] sm:$0xf]
  %v104 = vld [vmem:[%s3 + $0x10] sm:$0xf]
  %v105 = vld [vmem:[%s3 + $0x14] sm:$0xf]
  %v106 = vld [vmem:[%s3 + $0x18] sm:$0xf]
  %v107 = vld [vmem:[%s3 + $0x1c] sm:$0xf]
  %v108 = vld [vmem:[%s3 + $0x20] sm:$0xf]
  %v109 = vld [vmem:[%s3 + $0x24] sm:$0xf]
  %v110 = vld [vmem:[%s3 + $0x28] sm:$0xf]
  %v111 = vld [vmem:[%s3 + $0x2c] sm:$0xf]
  %v112 = vld [vmem:[%s3 + $0x30] sm:$0xf]
  %v113 = vld [vmem:[%s3 + $0x34] sm:$0xf]
  %v114 = vld [vmem:[%s3 + $0x38] sm:$0xf]
  %v115 = vld [vmem:[%s3 + $0x3c] sm:$0xf]
  %v116 = vld [vmem:[%s4] sm:$0x1]
  %v118 = vlaneseq
  %v119 = vshrl.u32 %v118, 7
  %v120 = vsub.s32 0, %v119
  %v121 = vrot.slane %v116, %v120
  %v139 = vunpack.c.l.b16 %v100
  %v140 = vunpack.c.l.b16 %v101
  %v141 = vunpack.c.l.b16 %v102
  %v142 = vunpack.c.l.b16 %v103
  %v143 = vunpack.c.l.b16 %v104
  %v144 = vunpack.c.l.b16 %v105
  %v145 = vunpack.c.l.b16 %v106
  %v146 = vunpack.c.l.b16 %v107
  %v147 = vunpack.c.l.b16 %v108
  %v148 = vunpack.c.l.b16 %v109
  %v149 = vunpack.c.l.b16 %v110
  %v150 = vunpack.c.l.b16 %v111
  %v151 = vunpack.c.l.b16 %v112
  %v152 = vunpack.c.l.b16 %v113
  %v153 = vunpack.c.l.b16 %v114
  %v154 = vunpack.c.l.b16 %v115
  %v155 = vpack.c.b16 %v140, %v139
  %v156 = vpack.c.b16 %v142, %v141
  %v157 = vpack.c.b16 %v144, %v143
  %v158 = vpack.c.b16 %v146, %v145
  %v159 = vpack.c.b16 %v148, %v147
  %v160 = vpack.c.b16 %v150, %v149
  %v161 = vpack.c.b16 %v152, %v151
  %v162 = vpack.c.b16 %v154, %v153
  %171 = vmatprep.subr.bf16.mxu0 0
  %172 = vmatpush1.bf16.msra.mxu0 %v155
  %173 = vmatprep.subr.bf16.mxu0 0
  %174 = vmatpush1.bf16.msra.mxu0 %v156
  %175 = vmatprep.subr.bf16.mxu0 0
  %176 = vmatpush1.bf16.msra.mxu0 %v157
  %177 = vmatprep.subr.bf16.mxu0 0
  %178 = vmatpush1.bf16.msra.mxu0 %v158
  %179 = vmatprep.subr.bf16.mxu0 0
  %180 = vmatpush1.bf16.msra.mxu0 %v159
  %181 = vmatprep.subr.bf16.mxu0 0
  %182 = vmatpush1.bf16.msra.mxu0 %v160
  %183 = vmatprep.subr.bf16.mxu0 0
  %184 = vmatpush1.bf16.msra.mxu0 %v161
  %185 = vmatprep.subr.bf16.mxu0 0
  %186 = vmatpush1.bf16.msra.mxu0 %v162
  %187 = vmatprep.subr.bf16.mxu0 0
  %188 = vmatpush1.bf16.msra.mxu0 0
  %189 = vmatprep.subr.bf16.mxu0 0
  %190 = vmatpush1.bf16.msra.mxu0 0
  %191 = vmatprep.subr.bf16.mxu0 0
  %192 = vmatpush1.bf16.msra.mxu0 0
  %193 = vmatprep.subr.bf16.mxu0 0
  %194 = vmatpush1.bf16.msra.mxu0 0
  %195 = vmatprep.subr.bf16.mxu0 0
  %196 = vmatpush1.bf16.msra.mxu0 0
  %197 = vmatprep.subr.bf16.mxu0 0
  %198 = vmatpush1.bf16.msra.mxu0 0
  %199 = vmatprep.subr.bf16.mxu0 0
  %200 = vmatpush1.bf16.msra.mxu0 0
  %201 = vmatprep.subr.bf16.mxu0 0
  %202 = vmatpush1.bf16.msra.mxu0 0
  %203 = vmatprep.mubr.bf16.mxu0 0
  %204 = vmatmul.mubr.bf16.gmra.mrb[0].mxu0 %v99
  %v205 = vpop.f32.mrb[0].mxu0
  %v206 = vadd.f32 %v121, %v205
  %v207 = vpop.f32.mrb[0].mxu0
  %v208 = vpop.f32.mrb[0].mxu0
  %v209 = vpop.f32.mrb[0].mxu0
  %210 = vdwg.mxu0
  %v211 = vmax.f32 %v206, 0.0
  %v212 = vld [vmem:[%s5] sm:$0x1]
  %v214 = vlaneseq
  %v215 = vshrl.u32 %v214, 7
  %v216 = vsub.s32 0, %v215
  %v217 = vrot.slane %v212, %v216
  %v219 = vmul.f32 %v211, %v217
  %vm220 = vcmask 523264
  %v221 = vsel %vm220, %v219, 0.0
  %222 = vadd.xlane.f32.xlu0 %v221
  %v223 = vpop.xlane.xlu0 %222
  %v224 = vld [vmem:[#allocation2] sm:$0x1]
  %v226 = vlaneseq
  %v227 = vshrl.u32 %v226, 7
  %v228 = vsub.s32 0, %v227
  %v229 = vrot.slane %v224, %v228
  %v231 = vadd.f32 %v223, %v229
  %vm232 = vcmask 7168
  %233 = vst.msk [vmem:[%s7] sm:$0xff] %vm232, %v231
  // Predicated region
  $region30: #{tpu_custom_call.1} parent=0 // pred_check
    _
  $region31: #{tpu_custom_call.1} parent=0 // pred_check_branch
    %235 = sbr.rel (0) target = $region33
  $region32: #{tpu_custom_call.1} parent=0 // pred_region
    _
  $region33: #{tpu_custom_call.1} parent=0 // pred_fallthru
    _
  // Predicated region
  $region34: #{tpu_custom_call.1} parent=0 // pred_check
    _
  $region35: #{tpu_custom_call.1} parent=0 // pred_check_branch
    %237 = sbr.rel (0) target = $region37
  $region36: #{tpu_custom_call.1} parent=0 // pred_region
    _
  $region37: #{tpu_custom_call.1} parent=0 // pred_fallthru
    _

</llo_original>
